<compile_context>
chip_gen: v7x
topology: tpu7x:2x2x1
jax: 0.10.0
libtpu: 0.0.40
codegen_flags: <defaults>
</compile_context>

<pallas_src>
import jax
import jax.numpy as jnp
from jax.experimental import pallas as pl
from jax.experimental.pallas import tpu as pltpu


def _upsample_head_kernel(x_ref, w1_ref, b1_ref, w2_ref, b2_ref, o_ref):
    # x_ref: (tm, C) tile of flattened fused_features.
    x = x_ref[...]
    # h = ReLU(x @ W1 + b1)   (W1 pre-transposed to (C, hidden))
    h = jnp.dot(x, w1_ref[...], preferred_element_type=jnp.float32) + b1_ref[...]
    h = jnp.maximum(h, 0.0)
    # out = h @ W2 + b2       (W2 pre-transposed to (hidden, 3*up_factor))
    out = jnp.dot(h, w2_ref[...], preferred_element_type=jnp.float32) + b2_ref[...]
    o_ref[...] = out.astype(o_ref.dtype)


def _round_up(x, m):
    return (x + m - 1) // m * m


def upsample_head(fused_features, w1, b1, w2, b2, up_factor, *, tm=2048):
    """UpsampleHead forward.

    fused_features: (B, N, C)
    w1: (C, hidden), b1: (hidden,)        -- PyTorch Linear weights pre-transposed
    w2: (hidden, 3*up_factor), b2: (3*up_factor,)
    returns: (B, N*up_factor, 3)
    """
    B, N, C = fused_features.shape
    hidden = w1.shape[1]
    out_dim = w2.shape[1]
    assert out_dim == 3 * up_factor

    rows = B * N
    x2d = fused_features.reshape(rows, C)

    # Large row tile; pad rows up to a tile multiple instead of asserting.
    tm = max(8, min(tm, _round_up(rows, 8)))
    rows_p = _round_up(rows, tm)
    if rows_p != rows:
        x2d = jnp.pad(x2d, ((0, rows_p - rows), (0, 0)))

    b1_2d = b1.reshape(1, hidden)
    b2_2d = b2.reshape(1, out_dim)

    out = pl.pallas_call(
        _upsample_head_kernel,
        out_shape=jax.ShapeDtypeStruct((rows_p, out_dim), fused_features.dtype),
        grid=(rows_p // tm,),
        in_specs=[
            pl.BlockSpec((tm, C), lambda i: (i, 0)),            # activation rows tile
            pl.BlockSpec((C, hidden), lambda i: (0, 0)),        # W1 (resident)
            pl.BlockSpec((1, hidden), lambda i: (0, 0)),        # b1
            pl.BlockSpec((hidden, out_dim), lambda i: (0, 0)),  # W2 (resident)
            pl.BlockSpec((1, out_dim), lambda i: (0, 0)),       # b2
        ],
        out_specs=pl.BlockSpec((tm, out_dim), lambda i: (i, 0)),
        compiler_params=pltpu.CompilerParams(
            dimension_semantics=("parallel",),
            vmem_limit_bytes=32 * 1024 * 1024,
        ),
    )(x2d, w1, b1_2d, w2, b2_2d)

    out = out[:rows]
    return out.reshape(B, N * up_factor, 3)


def reference_jax(fused_features, w1, b1, w2, b2, up_factor):
    B, N, _ = fused_features.shape
    h = jnp.maximum(fused_features @ w1 + b1, 0.0)
    out = h @ w2 + b2
    return out.reshape(B, N * up_factor, 3)


if __name__ == "__main__":
    key = jax.random.PRNGKey(0)
    B, N, C = 2, 64, 128        # batch, num_points, input_dim
    up_factor = 4
    hidden = 128                # fixed by the module
    out_dim = 3 * up_factor

    kx, kw1, kb1, kw2, kb2 = jax.random.split(key, 5)
    x = jax.random.normal(kx, (B, N, C), dtype=jnp.float32)

    # nn.Linear-style init; weights stored pre-transposed so the kernel does x @ W.
    bound1 = 1.0 / float(C) ** 0.5
    w1 = jax.random.uniform(kw1, (C, hidden), jnp.float32, -bound1, bound1)
    b1 = jax.random.uniform(kb1, (hidden,), jnp.float32, -bound1, bound1)
    bound2 = 1.0 / float(hidden) ** 0.5
    w2 = jax.random.uniform(kw2, (hidden, out_dim), jnp.float32, -bound2, bound2)
    b2 = jax.random.uniform(kb2, (out_dim,), jnp.float32, -bound2, bound2)

    out = upsample_head(x, w1, b1, w2, b2, up_factor)
    out = jax.block_until_ready(out)

    ref = reference_jax(x, w1, b1, w2, b2, up_factor)
    assert out.shape == (B, N * up_factor, 3)
    assert jnp.allclose(out, ref, atol=1e-4, rtol=1e-4)

    print("KERNEL_OK")
</pallas_src>

<mosaic_0001>
module attributes {stable_mosaic.version = 11 : i64} {
  func.func @_upsample_head_kernel(%arg0: i32, %arg1: memref<128x128xf32, #tpu.memory_space<vmem>>, %arg2: memref<128x128xf32, #tpu.memory_space<vmem>>, %arg3: memref<1x128xf32, #tpu.memory_space<vmem>>, %arg4: memref<128x12xf32, #tpu.memory_space<vmem>>, %arg5: memref<1x12xf32, #tpu.memory_space<vmem>>, %arg6: memref<128x12xf32, #tpu.memory_space<vmem>>) attributes {dimension_semantics = [#tpu.dimension_semantics<parallel>], iteration_bounds = array<i64: 1>, scalar_prefetch = 0 : i64, scratch_operands = 0 : i64, tpu.core_type = #tpu.core_type<tc>, window_params = [{transform_indices = @transform_0, window_bounds = array<i64: 128, 128>}, {pipeline_mode = #tpu.pipeline_mode<synchronous>, transform_indices = @transform_1, window_bounds = array<i64: 128, 128>}, {pipeline_mode = #tpu.pipeline_mode<synchronous>, transform_indices = @transform_2, window_bounds = array<i64: 1, 128>}, {pipeline_mode = #tpu.pipeline_mode<synchronous>, transform_indices = @transform_3, window_bounds = array<i64: 128, 12>}, {pipeline_mode = #tpu.pipeline_mode<synchronous>, transform_indices = @transform_4, window_bounds = array<i64: 1, 12>}, {transform_indices = @transform_5, window_bounds = array<i64: 128, 12>}]} {
    %c0 = arith.constant 0 : index
    %c0_0 = arith.constant 0 : index
    %0 = vector.load %arg1[%c0, %c0_0] : memref<128x128xf32, #tpu.memory_space<vmem>>, vector<128x128xf32>
    %c0_1 = arith.constant 0 : index
    %c0_2 = arith.constant 0 : index
    %1 = vector.load %arg2[%c0_1, %c0_2] : memref<128x128xf32, #tpu.memory_space<vmem>>, vector<128x128xf32>
    %cst = arith.constant dense<0.000000e+00> : vector<128x128xf32>
    %2 = tpu.matmul %0, %1, %cst {dimension_numbers = #tpu.dot_dimension_numbers<[1], [0], [0], [1], [0, 0, 1, 1], [], []>} : vector<128x128xf32>, vector<128x128xf32>, vector<128x128xf32> -> vector<128x128xf32>
    %c0_3 = arith.constant 0 : index
    %c0_4 = arith.constant 0 : index
    %3 = vector.load %arg3[%c0_3, %c0_4] : memref<1x128xf32, #tpu.memory_space<vmem>>, vector<1x128xf32>
    %4 = vector.broadcast %3 : vector<1x128xf32> to vector<128x128xf32>
    %5 = arith.addf %2, %4 : vector<128x128xf32>
    %cst_5 = arith.constant 0.000000e+00 : f32
    %6 = vector.broadcast %cst_5 : f32 to vector<128x128xf32>
    %7 = arith.maximumf %5, %6 : vector<128x128xf32>
    %c0_6 = arith.constant 0 : index
    %c0_7 = arith.constant 0 : index
    %8 = vector.load %arg4[%c0_6, %c0_7] : memref<128x12xf32, #tpu.memory_space<vmem>>, vector<128x12xf32>
    %cst_8 = arith.constant dense<0.000000e+00> : vector<128x12xf32>
    %9 = tpu.matmul %7, %8, %cst_8 {dimension_numbers = #tpu.dot_dimension_numbers<[1], [0], [0], [1], [0, 0, 1, 1], [], []>} : vector<128x128xf32>, vector<128x12xf32>, vector<128x12xf32> -> vector<128x12xf32>
    %c0_9 = arith.constant 0 : index
    %c0_10 = arith.constant 0 : index
    %10 = vector.load %arg5[%c0_9, %c0_10] : memref<1x12xf32, #tpu.memory_space<vmem>>, vector<1x12xf32>
    %11 = vector.broadcast %10 : vector<1x12xf32> to vector<128x12xf32>
    %12 = arith.addf %9, %11 : vector<128x12xf32>
    %c0_11 = arith.constant 0 : index
    %c0_12 = arith.constant 0 : index
    %13 = vector.load %arg6[%c0_11, %c0_12] : memref<128x12xf32, #tpu.memory_space<vmem>>, vector<128x12xf32>
    tpu.vector_store %arg6[%c0_11, %c0_12], %12 {strides = array<i32>} : memref<128x12xf32, #tpu.memory_space<vmem>>, vector<128x12xf32>,
    return
  }
  func.func @transform_0(%arg0: i32) -> (i32, i32) {
    %c0_i32 = arith.constant 0 : i32
    %c0_i32_0 = arith.constant 0 : i32
    return %arg0, %c0_i32 : i32, i32
  }
  func.func @transform_1(%arg0: i32) -> (i32, i32) {
    %c0_i32 = arith.constant 0 : i32
    %c0_i32_0 = arith.constant 0 : i32
    %c0_i32_1 = arith.constant 0 : i32
    return %c0_i32, %c0_i32_0 : i32, i32
  }
  func.func @transform_2(%arg0: i32) -> (i32, i32) {
    %c0_i32 = arith.constant 0 : i32
    %c0_i32_0 = arith.constant 0 : i32
    %c0_i32_1 = arith.constant 0 : i32
    return %c0_i32, %c0_i32_0 : i32, i32
  }
  func.func @transform_3(%arg0: i32) -> (i32, i32) {
    %c0_i32 = arith.constant 0 : i32
    %c0_i32_0 = arith.constant 0 : i32
    %c0_i32_1 = arith.constant 0 : i32
    return %c0_i32, %c0_i32_0 : i32, i32
  }
  func.func @transform_4(%arg0: i32) -> (i32, i32) {
    %c0_i32 = arith.constant 0 : i32
    %c0_i32_0 = arith.constant 0 : i32
    %c0_i32_1 = arith.constant 0 : i32
    return %c0_i32, %c0_i32_0 : i32, i32
  }
  func.func @transform_5(%arg0: i32) -> (i32, i32) {
    %c0_i32 = arith.constant 0 : i32
    %c0_i32_0 = arith.constant 0 : i32
    return %arg0, %c0_i32 : i32, i32
  }
}

</mosaic_0001>

<llo_original>
// kernel: tpu_custom_call.1
$region0: #{tpu_custom_call.1}
  #allocation0 [shape = 'u32[]', space=smem, size = 0x4, offset = 0x4, fixed_abs, tag = 'smem constant byte address 0x4 - core index']
  #allocation1 [shape = 'u32[144,128]{1,0:T(1,128)}', space=vmem, size = 0x12000, scoped, tag = 'internal scratch']
  %s0 = inlined_call_operand.vmem [shape: f32[128,128], index: 0, kind: input, shape index: {}]
  %s1 = inlined_call_operand.hbm [shape: f32[128,128], index: 1, kind: input, shape index: {}]
  %s2 = inlined_call_operand.vmem [shape: f32[1,128], index: 2, kind: input, shape index: {}]
  %s3 = inlined_call_operand.vmem [shape: f32[128,12], index: 3, kind: input, shape index: {}]
  %s4 = inlined_call_operand.vmem [shape: f32[1,12], index: 4, kind: input, shape index: {}]
  %s5 = inlined_call_operand.vmem [shape: f32[128,12], index: 5, kind: output, shape index: {}]
  %s6 = sld [smem:[#allocation0]]
  $region34: #{tpu_custom_call.1} parent=0
    _
  %s8 = ssub.s32 1, %s6
  %s9 = scalar_select 0, %s8, %s6
  $region1: #{tpu_custom_call.1} parent=0
    #allocation2 [shape = 'u8[65536]{0}', space=vmem, size = 0x10000, scoped, tag = 'input window, operand 1, single buffered']
    #allocation3 [shape = 's32[1]{0}', space=sflag, size = 0x4, scoped, tag = 'scoped memory for tpu_custom_call.1']
    %10 = vsyncpa [#allocation3], 0
    // Predicated region
    $region2: #{tpu_custom_call.1} parent=1 // pred_check
      _
    $region3: #{tpu_custom_call.1} parent=1 // pred_check_branch
      %12 = sbr.rel (0) target = $region5
    $region4: #{tpu_custom_call.1} parent=1 // pred_region
      _
    $region5: #{tpu_custom_call.1} parent=1 // pred_fallthru
      _
    // Predicated region
    $region6: #{tpu_custom_call.1} parent=1 // pred_check
      _
    $region7: #{tpu_custom_call.1} parent=1 // pred_check_branch
      %14 = sbr.rel (0) target = $region9
    $region8: #{tpu_custom_call.1} parent=1 // pred_region
      %s16 = ssub.s32 2048, 2048
      %17 = vsyncadd [#allocation3], %s16
      %s18 = sshll.u32 [#allocation2], 4
      %s19 = int_to_ptr.vmem [resolvable:$true] %s18
      %24 = dma.hbm_to_vmem [thread:$0]  %s1, 2048, %s19, [#allocation3], 128, 128, 8
    $region9: #{tpu_custom_call.1} parent=1 // pred_fallthru
      _
    // Predicated region
    $region10: #{tpu_custom_call.1} parent=1 // pred_check
      _
    $region11: #{tpu_custom_call.1} parent=1 // pred_check_branch
      %26 = sbr.rel (0) target = $region13
    $region12: #{tpu_custom_call.1} parent=1 // pred_region
      _
    $region13: #{tpu_custom_call.1} parent=1 // pred_fallthru
      _
    // Predicated region
    $region14: #{tpu_custom_call.1} parent=1 // pred_check
      _
    $region15: #{tpu_custom_call.1} parent=1 // pred_check_branch
      %28 = sbr.rel (0) target = $region17
    $region16: #{tpu_custom_call.1} parent=1 // pred_region
      _
    $region17: #{tpu_custom_call.1} parent=1 // pred_fallthru
      _
    // Predicated region
    $region18: #{tpu_custom_call.1} parent=1 // pred_check
      _
    $region19: #{tpu_custom_call.1} parent=1 // pred_check_branch
      %30 = sbr.rel (0) target = $region21
    $region20: #{tpu_custom_call.1} parent=1 // pred_region
      _
    $region21: #{tpu_custom_call.1} parent=1 // pred_fallthru
      _
    // Predicated region
    $region22: #{tpu_custom_call.1} parent=1 // pred_check
      _
    $region23: #{tpu_custom_call.1} parent=1 // pred_check_branch
      %32 = sbr.rel (0) target = $region25
    $region24: #{tpu_custom_call.1} parent=1 // pred_region
      %33 = dma.done [#allocation3], 2048
    $region25: #{tpu_custom_call.1} parent=1 // pred_fallthru
      _
    %v34 = vld [vmem:[%s0] sm:$0xff]
    %v35 = vld [vmem:[%s0 + $0x8] sm:$0xff]
    %v36 = vld [vmem:[%s0 + $0x10] sm:$0xff]
    %v37 = vld [vmem:[%s0 + $0x18] sm:$0xff]
    %v38 = vld [vmem:[%s0 + $0x20] sm:$0xff]
    %v39 = vld [vmem:[%s0 + $0x28] sm:$0xff]
    %v40 = vld [vmem:[%s0 + $0x30] sm:$0xff]
    %v41 = vld [vmem:[%s0 + $0x38] sm:$0xff]
    %v42 = vld [vmem:[%s0 + $0x40] sm:$0xff]
    %v43 = vld [vmem:[%s0 + $0x48] sm:$0xff]
    %v44 = vld [vmem:[%s0 + $0x50] sm:$0xff]
    %v45 = vld [vmem:[%s0 + $0x58] sm:$0xff]
    %v46 = vld [vmem:[%s0 + $0x60] sm:$0xff]
    %v47 = vld [vmem:[%s0 + $0x68] sm:$0xff]
    %v48 = vld [vmem:[%s0 + $0x70] sm:$0xff]
    %v49 = vld [vmem:[%s0 + $0x78] sm:$0xff]
    %v50 = vld [vmem:[#allocation2] sm:$0xff]
    %v51 = vld [vmem:[#allocation2 + $0x8] sm:$0xff]
    %v52 = vld [vmem:[#allocation2 + $0x10] sm:$0xff]
    %v53 = vld [vmem:[#allocation2 + $0x18] sm:$0xff]
    %v54 = vld [vmem:[#allocation2 + $0x20] sm:$0xff]
    %v55 = vld [vmem:[#allocation2 + $0x28] sm:$0xff]
    %v56 = vld [vmem:[#allocation2 + $0x30] sm:$0xff]
    %v57 = vld [vmem:[#allocation2 + $0x38] sm:$0xff]
    %v58 = vld [vmem:[#allocation2 + $0x40] sm:$0xff]
    %v59 = vld [vmem:[#allocation2 + $0x48] sm:$0xff]
    %v60 = vld [vmem:[#allocation2 + $0x50] sm:$0xff]
    %v61 = vld [vmem:[#allocation2 + $0x58] sm:$0xff]
    %v62 = vld [vmem:[#allocation2 + $0x60] sm:$0xff]
    %v63 = vld [vmem:[#allocation2 + $0x68] sm:$0xff]
    %v64 = vld [vmem:[#allocation2 + $0x70] sm:$0xff]
    %v65 = vld [vmem:[#allocation2 + $0x78] sm:$0xff]
    %v66 = vld [vmem:[%s2] sm:$0x1]
    %v68 = vlaneseq
    %v69 = vshrl.u32 %v68, 7
    %v70 = vsub.s32 0, %v69
    %v71 = vrot.slane %v66, %v70
    %73 = vmatprep.subr.mxu0 0.0
    %74 = vmatpush1.msra.mxu0 %v50
    %75 = vmatprep.subr.mxu0 0.0
    %76 = vmatpush1.msra.mxu0 %v51
    %77 = vmatprep.subr.mxu0 0.0
    %78 = vmatpush1.msra.mxu0 %v52
    %79 = vmatprep.subr.mxu0 0.0
    %80 = vmatpush1.msra.mxu0 %v53
    %81 = vmatprep.subr.mxu0 0.0
    %82 = vmatpush1.msra.mxu0 %v54
    %83 = vmatprep.subr.mxu0 0.0
    %84 = vmatpush1.msra.mxu0 %v55
    %85 = vmatprep.subr.mxu0 0.0
    %86 = vmatpush1.msra.mxu0 %v56
    %87 = vmatprep.subr.mxu0 0.0
    %88 = vmatpush1.msra.mxu0 %v57
    %89 = vmatprep.subr.mxu0 0.0
    %90 = vmatpush1.msra.mxu0 %v58
    %91 = vmatprep.subr.mxu0 0.0
    %92 = vmatpush1.msra.mxu0 %v59
    %93 = vmatprep.subr.mxu0 0.0
    %94 = vmatpush1.msra.mxu0 %v60
    %95 = vmatprep.subr.mxu0 0.0
    %96 = vmatpush1.msra.mxu0 %v61
    %97 = vmatprep.subr.mxu0 0.0
    %98 = vmatpush1.msra.mxu0 %v62
    %99 = vmatprep.subr.mxu0 0.0
    %100 = vmatpush1.msra.mxu0 %v63
    %101 = vmatprep.subr.mxu0 0.0
    %102 = vmatpush1.msra.mxu0 %v64
    %103 = vmatprep.subr.mxu0 0.0
    %104 = vmatpush1.msra.mxu0 %v65
    %105 = vmatprep.subr.mxu0 0.0
    %106 = vmatpush1.msra.mxu0 0.0
    %107 = vmatprep.subr.mxu0 0.0
    %108 = vmatpush1.msra.mxu0 0.0
    %109 = vmatprep.subr.mxu0 0.0
    %110 = vmatpush1.msra.mxu0 0.0
    %111 = vmatprep.subr.mxu0 0.0
    %112 = vmatpush1.msra.mxu0 0.0
    %113 = vmatprep.subr.mxu0 0.0
    %114 = vmatpush1.msra.mxu0 0.0
    %115 = vmatprep.subr.mxu0 0.0
    %116 = vmatpush1.msra.mxu0 0.0
    %117 = vmatprep.subr.mxu0 0.0
    %118 = vmatpush1.msra.mxu0 0.0
    %119 = vmatprep.subr.mxu0 0.0
    %120 = vmatpush1.msra.mxu0 0.0
    %121 = vmatprep.subr.mxu0 0.0
    %122 = vmatpush1.msra.mxu0 0.0
    %123 = vmatprep.subr.mxu0 0.0
    %124 = vmatpush1.msra.mxu0 0.0
    %125 = vmatprep.subr.mxu0 0.0
    %126 = vmatpush1.msra.mxu0 0.0
    %127 = vmatprep.subr.mxu0 0.0
    %128 = vmatpush1.msra.mxu0 0.0
    %129 = vmatprep.subr.mxu0 0.0
    %130 = vmatpush1.msra.mxu0 0.0
    %131 = vmatprep.subr.mxu0 0.0
    %132 = vmatpush1.msra.mxu0 0.0
    %133 = vmatprep.subr.mxu0 0.0
    %134 = vmatpush1.msra.mxu0 0.0
    %135 = vmatprep.subr.mxu0 0.0
    %136 = vmatpush1.msra.mxu0 0.0
    %137 = vmatprep.mubr.f32.mxu0 0.0
    %138 = vmatmul.mubr.f32.gmra.mrb[0].mxu0 %v34
    %v139 = vpop.f32.mrb[0].mxu0
    %v140 = vadd.f32 %v71, %v139
    %v141 = vpop.f32.mrb[0].mxu0
    %142 = vmatprep.mubr.f32.mxu0 0.0
    %143 = vmatmul.mubr.f32.gmra.mrb[0].mxu0 %v35
    %v144 = vpop.f32.mrb[0].mxu0
    %v145 = vadd.f32 %v71, %v144
    %v146 = vpop.f32.mrb[0].mxu0
    %147 = vmatprep.mubr.f32.mxu0 0.0
    %148 = vmatmul.mubr.f32.gmra.mrb[0].mxu0 %v36
    %v149 = vpop.f32.mrb[0].mxu0
    %v150 = vadd.f32 %v71, %v149
    %v151 = vpop.f32.mrb[0].mxu0
    %152 = vmatprep.mubr.f32.mxu0 0.0
    %153 = vmatmul.mubr.f32.gmra.mrb[0].mxu0 %v37
    %v154 = vpop.f32.mrb[0].mxu0
    %v155 = vadd.f32 %v71, %v154
    %v156 = vpop.f32.mrb[0].mxu0
    %157 = vmatprep.mubr.f32.mxu0 0.0
    %158 = vmatmul.mubr.f32.gmra.mrb[0].mxu0 %v38
    %v159 = vpop.f32.mrb[0].mxu0
    %v160 = vadd.f32 %v71, %v159
    %v161 = vpop.f32.mrb[0].mxu0
    %162 = vmatprep.mubr.f32.mxu0 0.0
    %163 = vmatmul.mubr.f32.gmra.mrb[0].mxu0 %v39
    %v164 = vpop.f32.mrb[0].mxu0
    %v165 = vadd.f32 %v71, %v164
    %v166 = vpop.f32.mrb[0].mxu0
    %167 = vmatprep.mubr.f32.mxu0 0.0
    %168 = vmatmul.mubr.f32.gmra.mrb[0].mxu0 %v40
    %v169 = vpop.f32.mrb[0].mxu0
    %v170 = vadd.f32 %v71, %v169
    %v171 = vpop.f32.mrb[0].mxu0
    %172 = vmatprep.mubr.f32.mxu0 0.0
    %173 = vmatmul.mubr.f32.gmra.mrb[0].mxu0 %v41
    %v174 = vpop.f32.mrb[0].mxu0
    %v175 = vadd.f32 %v71, %v174
    %v176 = vpop.f32.mrb[0].mxu0
    %177 = vmatprep.mubr.f32.mxu0 0.0
    %178 = vmatmul.mubr.f32.gmra.mrb[0].mxu0 %v42
    %v179 = vpop.f32.mrb[0].mxu0
    %v180 = vadd.f32 %v71, %v179
    %v181 = vpop.f32.mrb[0].mxu0
    %182 = vmatprep.mubr.f32.mxu0 0.0
    %183 = vmatmul.mubr.f32.gmra.mrb[0].mxu0 %v43
    %v184 = vpop.f32.mrb[0].mxu0
    %v185 = vadd.f32 %v71, %v184
    %v186 = vpop.f32.mrb[0].mxu0
    %187 = vmatprep.mubr.f32.mxu0 0.0
    %188 = vmatmul.mubr.f32.gmra.mrb[0].mxu0 %v44
    %v189 = vpop.f32.mrb[0].mxu0
    %v190 = vadd.f32 %v71, %v189
    %v191 = vpop.f32.mrb[0].mxu0
    %192 = vmatprep.mubr.f32.mxu0 0.0
    %193 = vmatmul.mubr.f32.gmra.mrb[0].mxu0 %v45
    %v194 = vpop.f32.mrb[0].mxu0
    %v195 = vadd.f32 %v71, %v194
    %v196 = vpop.f32.mrb[0].mxu0
    %197 = vmatprep.mubr.f32.mxu0 0.0
    %198 = vmatmul.mubr.f32.gmra.mrb[0].mxu0 %v46
    %v199 = vpop.f32.mrb[0].mxu0
    %v200 = vadd.f32 %v71, %v199
    %v201 = vpop.f32.mrb[0].mxu0
    %202 = vmatprep.mubr.f32.mxu0 0.0
    %203 = vmatmul.mubr.f32.gmra.mrb[0].mxu0 %v47
    %v204 = vpop.f32.mrb[0].mxu0
    %v205 = vadd.f32 %v71, %v204
    %v206 = vpop.f32.mrb[0].mxu0
    %207 = vmatprep.mubr.f32.mxu0 0.0
    %208 = vmatmul.mubr.f32.gmra.mrb[0].mxu0 %v48
    %v209 = vpop.f32.mrb[0].mxu0
    %v210 = vadd.f32 %v71, %v209
    %v211 = vpop.f32.mrb[0].mxu0
    %212 = vmatprep.mubr.f32.mxu0 0.0
    %213 = vmatmul.mubr.f32.gmra.mrb[0].mxu0 %v49
    %v214 = vpop.f32.mrb[0].mxu0
    %v215 = vadd.f32 %v71, %v214
    %v216 = vpop.f32.mrb[0].mxu0
    %217 = vdwg.mxu0
    %v218 = vmax.f32 %v140, 0.0
    %v219 = vmax.f32 %v145, 0.0
    %v220 = vmax.f32 %v150, 0.0
    %v221 = vmax.f32 %v155, 0.0
    %v222 = vmax.f32 %v160, 0.0
    %v223 = vmax.f32 %v165, 0.0
    %v224 = vmax.f32 %v170, 0.0
    %v225 = vmax.f32 %v175, 0.0
    %v226 = vmax.f32 %v180, 0.0
    %v227 = vmax.f32 %v185, 0.0
    %v228 = vmax.f32 %v190, 0.0
    %v229 = vmax.f32 %v195, 0.0
    %v230 = vmax.f32 %v200, 0.0
    %v231 = vmax.f32 %v205, 0.0
    %v232 = vmax.f32 %v210, 0.0
    %v233 = vmax.f32 %v215, 0.0
    %v234 = vld [vmem:[%s3] sm:$0xff]
    %v235 = vld [vmem:[%s3 + $0x8] sm:$0xff]
    %v236 = vld [vmem:[%s3 + $0x10] sm:$0xff]
    %v237 = vld [vmem:[%s3 + $0x18] sm:$0xff]
    %v238 = vld [vmem:[%s3 + $0x20] sm:$0xff]
    %v239 = vld [vmem:[%s3 + $0x28] sm:$0xff]
    %v240 = vld [vmem:[%s3 + $0x30] sm:$0xff]
    %v241 = vld [vmem:[%s3 + $0x38] sm:$0xff]
    %v242 = vld [vmem:[%s3 + $0x40] sm:$0xff]
    %v243 = vld [vmem:[%s3 + $0x48] sm:$0xff]
    %v244 = vld [vmem:[%s3 + $0x50] sm:$0xff]
    %v245 = vld [vmem:[%s3 + $0x58] sm:$0xff]
    %v246 = vld [vmem:[%s3 + $0x60] sm:$0xff]
    %v247 = vld [vmem:[%s3 + $0x68] sm:$0xff]
    %v248 = vld [vmem:[%s3 + $0x70] sm:$0xff]
    %v249 = vld [vmem:[%s3 + $0x78] sm:$0xff]
    %v250 = vld [vmem:[%s4] sm:$0x1]
    %v252 = vlaneseq
    %v253 = vshrl.u32 %v252, 7
    %v254 = vsub.s32 0, %v253
    %v255 = vrot.slane %v250, %v254
    %257 = vmatprep.subr.mxu0 0.0
    %258 = vmatpush1.msra.mxu0 %v234
    %259 = vmatprep.subr.mxu0 0.0
    %260 = vmatpush1.msra.mxu0 %v235
    %261 = vmatprep.subr.mxu0 0.0
    %262 = vmatpush1.msra.mxu0 %v236
    %263 = vmatprep.subr.mxu0 0.0
    %264 = vmatpush1.msra.mxu0 %v237
    %265 = vmatprep.subr.mxu0 0.0
    %266 = vmatpush1.msra.mxu0 %v238
    %267 = vmatprep.subr.mxu0 0.0
    %268 = vmatpush1.msra.mxu0 %v239
    %269 = vmatprep.subr.mxu0 0.0
    %270 = vmatpush1.msra.mxu0 %v240
    %271 = vmatprep.subr.mxu0 0.0
    %272 = vmatpush1.msra.mxu0 %v241
    %273 = vmatprep.subr.mxu0 0.0
    %274 = vmatpush1.msra.mxu0 %v242
    %275 = vmatprep.subr.mxu0 0.0
    %276 = vmatpush1.msra.mxu0 %v243
    %277 = vmatprep.subr.mxu0 0.0
    %278 = vmatpush1.msra.mxu0 %v244
    %279 = vmatprep.subr.mxu0 0.0
    %280 = vmatpush1.msra.mxu0 %v245
    %281 = vmatprep.subr.mxu0 0.0
    %282 = vmatpush1.msra.mxu0 %v246
    %283 = vmatprep.subr.mxu0 0.0
    %284 = vmatpush1.msra.mxu0 %v247
    %285 = vmatprep.subr.mxu0 0.0
    %286 = vmatpush1.msra.mxu0 %v248
    %287 = vmatprep.subr.mxu0 0.0
    %288 = vmatpush1.msra.mxu0 %v249
    %289 = vmatprep.subr.mxu0 0.0
    %290 = vmatpush1.msra.mxu0 0.0
    %291 = vmatprep.subr.mxu0 0.0
    %292 = vmatpush1.msra.mxu0 0.0
    %293 = vmatprep.subr.mxu0 0.0
    %294 = vmatpush1.msra.mxu0 0.0
    %295 = vmatprep.subr.mxu0 0.0
    %296 = vmatpush1.msra.mxu0 0.0
    %297 = vmatprep.subr.mxu0 0.0
    %298 = vmatpush1.msra.mxu0 0.0
    %299 = vmatprep.subr.mxu0 0.0
    %300 = vmatpush1.msra.mxu0 0.0
    %301 = vmatprep.subr.mxu0 0.0
    %302 = vmatpush1.msra.mxu0 0.0
    %303 = vmatprep.subr.mxu0 0.0
    %304 = vmatpush1.msra.mxu0 0.0
    %305 = vmatprep.subr.mxu0 0.0
    %306 = vmatpush1.msra.mxu0 0.0
    %307 = vmatprep.subr.mxu0 0.0
    %308 = vmatpush1.msra.mxu0 0.0
    %309 = vmatprep.subr.mxu0 0.0
    %310 = vmatpush1.msra.mxu0 0.0
    %311 = vmatprep.subr.mxu0 0.0
    %312 = vmatpush1.msra.mxu0 0.0
    %313 = vmatprep.subr.mxu0 0.0
    %314 = vmatpush1.msra.mxu0 0.0
    %315 = vmatprep.subr.mxu0 0.0
    %316 = vmatpush1.msra.mxu0 0.0
    %317 = vmatprep.subr.mxu0 0.0
    %318 = vmatpush1.msra.mxu0 0.0
    %319 = vmatprep.subr.mxu0 0.0
    %320 = vmatpush1.msra.mxu0 0.0
    %321 = vmatprep.mubr.f32.mxu0 0.0
    %322 = vmatmul.mubr.f32.gmra.mrb[0].mxu0 %v218
    %v323 = vpop.f32.mrb[0].mxu0
    %v324 = vadd.f32 %v255, %v323
    %v325 = vpop.f32.mrb[0].mxu0
    %326 = vmatprep.mubr.f32.mxu0 0.0
    %327 = vmatmul.mubr.f32.gmra.mrb[0].mxu0 %v219
    %v328 = vpop.f32.mrb[0].mxu0
    %v329 = vadd.f32 %v255, %v328
    %v330 = vpop.f32.mrb[0].mxu0
    %331 = vmatprep.mubr.f32.mxu0 0.0
    %332 = vmatmul.mubr.f32.gmra.mrb[0].mxu0 %v220
    %v333 = vpop.f32.mrb[0].mxu0
    %v334 = vadd.f32 %v255, %v333
    %v335 = vpop.f32.mrb[0].mxu0
    %336 = vmatprep.mubr.f32.mxu0 0.0
    %337 = vmatmul.mubr.f32.gmra.mrb[0].mxu0 %v221
    %v338 = vpop.f32.mrb[0].mxu0
    %v339 = vadd.f32 %v255, %v338
    %v340 = vpop.f32.mrb[0].mxu0
    %341 = vmatprep.mubr.f32.mxu0 0.0
    %342 = vmatmul.mubr.f32.gmra.mrb[0].mxu0 %v222
    %v343 = vpop.f32.mrb[0].mxu0
    %v344 = vadd.f32 %v255, %v343
    %v345 = vpop.f32.mrb[0].mxu0
    %346 = vmatprep.mubr.f32.mxu0 0.0
    %347 = vmatmul.mubr.f32.gmra.mrb[0].mxu0 %v223
    %v348 = vpop.f32.mrb[0].mxu0
    %v349 = vadd.f32 %v255, %v348
    %v350 = vpop.f32.mrb[0].mxu0
    %351 = vmatprep.mubr.f32.mxu0 0.0
    %352 = vmatmul.mubr.f32.gmra.mrb[0].mxu0 %v224
    %v353 = vpop.f32.mrb[0].mxu0
    %v354 = vadd.f32 %v255, %v353
    %v355 = vpop.f32.mrb[0].mxu0
    %356 = vmatprep.mubr.f32.mxu0 0.0
    %357 = vmatmul.mubr.f32.gmra.mrb[0].mxu0 %v225
    %v358 = vpop.f32.mrb[0].mxu0
    %v359 = vadd.f32 %v255, %v358
    %v360 = vpop.f32.mrb[0].mxu0
    %361 = vmatprep.mubr.f32.mxu0 0.0
    %362 = vmatmul.mubr.f32.gmra.mrb[0].mxu0 %v226
    %v363 = vpop.f32.mrb[0].mxu0
    %v364 = vadd.f32 %v255, %v363
    %v365 = vpop.f32.mrb[0].mxu0
    %366 = vmatprep.mubr.f32.mxu0 0.0
    %367 = vmatmul.mubr.f32.gmra.mrb[0].mxu0 %v227
    %v368 = vpop.f32.mrb[0].mxu0
    %v369 = vadd.f32 %v255, %v368
    %v370 = vpop.f32.mrb[0].mxu0
    %371 = vmatprep.mubr.f32.mxu0 0.0
    %372 = vmatmul.mubr.f32.gmra.mrb[0].mxu0 %v228
    %v373 = vpop.f32.mrb[0].mxu0
    %v374 = vadd.f32 %v255, %v373
    %v375 = vpop.f32.mrb[0].mxu0
    %376 = vmatprep.mubr.f32.mxu0 0.0
    %377 = vmatmul.mubr.f32.gmra.mrb[0].mxu0 %v229
    %v378 = vpop.f32.mrb[0].mxu0
    %v379 = vadd.f32 %v255, %v378
    %v380 = vpop.f32.mrb[0].mxu0
    %381 = vmatprep.mubr.f32.mxu0 0.0
    %382 = vmatmul.mubr.f32.gmra.mrb[0].mxu0 %v230
    %v383 = vpop.f32.mrb[0].mxu0
    %v384 = vadd.f32 %v255, %v383
    %v385 = vpop.f32.mrb[0].mxu0
    %386 = vmatprep.mubr.f32.mxu0 0.0
    %387 = vmatmul.mubr.f32.gmra.mrb[0].mxu0 %v231
    %v388 = vpop.f32.mrb[0].mxu0
    %v389 = vadd.f32 %v255, %v388
    %v390 = vpop.f32.mrb[0].mxu0
    %391 = vmatprep.mubr.f32.mxu0 0.0
    %392 = vmatmul.mubr.f32.gmra.mrb[0].mxu0 %v232
    %v393 = vpop.f32.mrb[0].mxu0
    %v394 = vadd.f32 %v255, %v393
    %v395 = vpop.f32.mrb[0].mxu0
    %396 = vmatprep.mubr.f32.mxu0 0.0
    %397 = vmatmul.mubr.f32.gmra.mrb[0].mxu0 %v233
    %v398 = vpop.f32.mrb[0].mxu0
    %v399 = vadd.f32 %v255, %v398
    %v400 = vpop.f32.mrb[0].mxu0
    %401 = vdwg.mxu0
    %vm402 = vcmask 97280
    %403 = vst.msk [vmem:[%s5] sm:$0xff] %vm402, %v324
    %404 = vst.msk [vmem:[%s5 + $0x8] sm:$0xff] %vm402, %v329
    %405 = vst.msk [vmem:[%s5 + $0x10] sm:$0xff] %vm402, %v334
    %406 = vst.msk [vmem:[%s5 + $0x18] sm:$0xff] %vm402, %v339
    %407 = vst.msk [vmem:[%s5 + $0x20] sm:$0xff] %vm402, %v344
    %408 = vst.msk [vmem:[%s5 + $0x28] sm:$0xff] %vm402, %v349
    %409 = vst.msk [vmem:[%s5 + $0x30] sm:$0xff] %vm402, %v354
    %410 = vst.msk [vmem:[%s5 + $0x38] sm:$0xff] %vm402, %v359
    %411 = vst.msk [vmem:[%s5 + $0x40] sm:$0xff] %vm402, %v364
    %412 = vst.msk [vmem:[%s5 + $0x48] sm:$0xff] %vm402, %v369
    %413 = vst.msk [vmem:[%s5 + $0x50] sm:$0xff] %vm402, %v374
    %414 = vst.msk [vmem:[%s5 + $0x58] sm:$0xff] %vm402, %v379
    %415 = vst.msk [vmem:[%s5 + $0x60] sm:$0xff] %vm402, %v384
    %416 = vst.msk [vmem:[%s5 + $0x68] sm:$0xff] %vm402, %v389
    %417 = vst.msk [vmem:[%s5 + $0x70] sm:$0xff] %vm402, %v394
    %418 = vst.msk [vmem:[%s5 + $0x78] sm:$0xff] %vm402, %v399
    // Predicated region
    $region26: #{tpu_custom_call.1} parent=1 // pred_check
      _
    $region27: #{tpu_custom_call.1} parent=1 // pred_check_branch
      %420 = sbr.rel (0) target = $region29
    $region28: #{tpu_custom_call.1} parent=1 // pred_region
      _
    $region29: #{tpu_custom_call.1} parent=1 // pred_fallthru
      _
    // Predicated region
    $region30: #{tpu_custom_call.1} parent=1 // pred_check
      _
    $region31: #{tpu_custom_call.1} parent=1 // pred_check_branch
      %422 = sbr.rel (0) target = $region33
    $region32: #{tpu_custom_call.1} parent=1 // pred_region
      _
    $region33: #{tpu_custom_call.1} parent=1 // pred_fallthru
      _
    %423 = vsyncpa [#allocation3], 1

</llo_original>
